<compile_context>
chip_gen: v5e
topology: v5e:2x2
jax: 0.10.0
libtpu: 0.0.40
codegen_flags: <defaults>
</compile_context>

<pallas_src>
import jax
import jax.numpy as jnp
from jax.experimental import pallas as pl
from jax.experimental.pallas import tpu as pltpu

LANE = 128   # lane-dense output width
K_IN = 3     # real input feature count


def _mlp_cf_kernel(x_ref, p_ref, o_ref):
    """Fused (folded) MLP + data-dependent branch.

    x_ref : VMEM (B, 3)     input rows (natural shape, full-array block)
    p_ref : VMEM (1, 4)     [w_eff[0], w_eff[1], w_eff[2], b_eff]
    o_ref : VMEM (B, LANE)  output, real data in [:, :1]
    """
    p = p_ref[...]                                   # (1, 4)
    w_row = p[:, :K_IN]                              # (1, 3)
    b_eff = p[:, K_IN:K_IN + 1]                      # (1, 1)

    # Folded Linear(3,2) -> Linear(2,1): per-row weighted sum + bias (VPU + XLU).
    h = jnp.sum(x_ref[...] * w_row, axis=1, keepdims=True) + b_eff   # (B, 1)

    # ForwardWithControlFlowTest: `if out.sum(): out * 2 else -out`.
    # Kept as a vector select on a scalar predicate (cheapest form on TPU).
    s = jnp.sum(h)
    res = jnp.where(s != 0.0, h * 2.0, -h)                            # (B, 1)

    # Lane-dense store; wrapper slices column 0.
    o_ref[...] = jnp.broadcast_to(res, o_ref.shape)


def prepare_params(w1, b1, w2, b2):
    """Fold the two torch nn.Linear layers into one (1, 4) parameter slab.

    w1: (2, 3), b1: (2,), w2: (1, 2), b2: (1,)  -- torch nn.Linear layout.
    Returns params of shape (1, 4) = [w_eff (1,3) | b_eff (1,1)].
    """
    w1 = jnp.asarray(w1, jnp.float32)
    b1 = jnp.asarray(b1, jnp.float32)
    w2 = jnp.asarray(w2, jnp.float32)
    b2 = jnp.asarray(b2, jnp.float32)
    w_eff = w2 @ w1                                  # (1, 3)
    b_eff = (w2 @ b1 + b2).reshape(1, 1)             # (1, 1)
    return jnp.concatenate([w_eff, b_eff], axis=1)   # (1, 4)


def _forward(x, params):
    B = x.shape[0]  # static under jit; each distinct B compiles once.
    out_padded = pl.pallas_call(
        _mlp_cf_kernel,
        out_shape=jax.ShapeDtypeStruct((B, LANE), jnp.float32),
        in_specs=[
            pl.BlockSpec(memory_space=pltpu.MemorySpace.VMEM),   # x (B, 3)
            pl.BlockSpec(memory_space=pltpu.MemorySpace.VMEM),   # params (1, 4)
        ],
        out_specs=pl.BlockSpec(memory_space=pltpu.MemorySpace.VMEM),
    )(x, params)
    return out_padded[:, :1]   # (B, 1), matching torch output shape


_forward_jit = jax.jit(_forward)


def model_with_control_flow(x, params):
    """x: (B, 3) float32; params: (1, 4) from prepare_params()."""
    return _forward_jit(x, params)


def _reference(x, w1, b1, w2, b2):
    h1 = x @ w1.T + b1
    h2 = h1 @ w2.T + b2
    return jnp.where(jnp.sum(h2) != 0.0, h2 * 2.0, -h2)


if __name__ == "__main__":
    key = jax.random.PRNGKey(0)
    kx, kw1, kb1, kw2, kb2 = jax.random.split(key, 5)

    B = 2  # original example uses (1, 3); any B works (one compile per B)
    x = jax.random.normal(kx, (B, 3), jnp.float32)

    # Deterministic parameters (shapes from nn.Linear(3,2) / nn.Linear(2,1)).
    w1 = jax.random.uniform(kw1, (2, 3), jnp.float32, -0.5, 0.5)
    b1 = jax.random.uniform(kb1, (2,), jnp.float32, -0.5, 0.5)
    w2 = jax.random.uniform(kw2, (1, 2), jnp.float32, -0.5, 0.5)
    b2 = jax.random.uniform(kb2, (1,), jnp.float32, -0.5, 0.5)

    params = prepare_params(w1, b1, w2, b2)   # folded once, reused every call

    out = jax.block_until_ready(model_with_control_flow(x, params))
    ref = _reference(x, w1, b1, w2, b2)
    assert out.shape == (B, 1), out.shape
    assert jnp.allclose(out, ref, atol=1e-5, rtol=1e-5), (out, ref)

    # Exercise the `else` branch (sum == 0) with hand-crafted parameters/input.
    w1z = jnp.array([[1.0, 0.0, 0.0], [0.0, 0.0, 0.0]], jnp.float32)
    b1z = jnp.zeros((2,), jnp.float32)
    w2z = jnp.array([[1.0, 0.0]], jnp.float32)
    b2z = jnp.zeros((1,), jnp.float32)
    xz = jnp.array([[1.0, 0.0, 0.0], [-1.0, 0.0, 0.0]], jnp.float32)
    params_z = prepare_params(w1z, b1z, w2z, b2z)
    out_z = jax.block_until_ready(model_with_control_flow(xz, params_z))
    ref_z = _reference(xz, w1z, b1z, w2z, b2z)       # -> [[-1.], [1.]]
    assert jnp.allclose(out_z, ref_z, atol=1e-5, rtol=1e-5), (out_z, ref_z)

    print("KERNEL_OK")
</pallas_src>

<mosaic_0001>
module attributes {stable_mosaic.version = 11 : i64} {
  func.func @_mlp_cf_kernel(%arg0: memref<2x3xf32, #tpu.memory_space<vmem>>, %arg1: memref<1x4xf32, #tpu.memory_space<vmem>>, %arg2: memref<2x128xf32, #tpu.memory_space<vmem>>) attributes {dimension_semantics = [], scalar_prefetch = 0 : i64, scratch_operands = 0 : i64, tpu.core_type = #tpu.core_type<tc>} {
    %c0 = arith.constant 0 : index
    %c0_0 = arith.constant 0 : index
    %0 = vector.load %arg1[%c0, %c0_0] : memref<1x4xf32, #tpu.memory_space<vmem>>, vector<1x4xf32>
    %1 = vector.extract_strided_slice %0 {offsets = [0, 0], sizes = [1, 3], strides = [1, 1]} : vector<1x4xf32> to vector<1x3xf32>
    %2 = vector.extract_strided_slice %0 {offsets = [0, 3], sizes = [1, 1], strides = [1, 1]} : vector<1x4xf32> to vector<1x1xf32>
    %c0_1 = arith.constant 0 : index
    %c0_2 = arith.constant 0 : index
    %3 = vector.load %arg0[%c0_1, %c0_2] : memref<2x3xf32, #tpu.memory_space<vmem>>, vector<2x3xf32>
    %4 = vector.broadcast %1 : vector<1x3xf32> to vector<2x3xf32>
    %5 = arith.mulf %3, %4 : vector<2x3xf32>
    %cst = arith.constant dense<0.000000e+00> : vector<2xf32>
    %6 = vector.multi_reduction <add>, %5, %cst [1] : vector<2x3xf32> to vector<2xf32>
    %7 = vector.shape_cast %6 : vector<2xf32> to vector<2x1xf32>
    %8 = vector.broadcast %2 : vector<1x1xf32> to vector<2x1xf32>
    %9 = arith.addf %7, %8 : vector<2x1xf32>
    %10 = vector.shape_cast %9 : vector<2x1xf32> to vector<1x2x1xf32>
    %cst_3 = arith.constant dense<0.000000e+00> : vector<1xf32>
    %11 = vector.multi_reduction <add>, %10, %cst_3 [1, 2] : vector<1x2x1xf32> to vector<1xf32>
    %12 = vector.shape_cast %11 : vector<1xf32> to vector<1x1x1xf32>
    %13 = vector.extract %12[0, 0, 0] : f32 from vector<1x1x1xf32>
    %cst_4 = arith.constant 0.000000e+00 : f32
    %14 = arith.cmpf one, %13, %cst_4 : f32
    %cst_5 = arith.constant 2.000000e+00 : f32
    %15 = vector.broadcast %cst_5 : f32 to vector<2x1xf32>
    %16 = arith.mulf %9, %15 : vector<2x1xf32>
    %cst_6 = arith.constant 0.000000e+00 : f32
    %17 = vector.broadcast %cst_6 : f32 to vector<2x1xf32>
    %18 = arith.subf %17, %9 : vector<2x1xf32>
    %19 = arith.select %14, %16, %18 : vector<2x1xf32>
    %20 = vector.shape_cast %19 : vector<2x1xf32> to vector<2x1xf32>
    %21 = vector.broadcast %20 : vector<2x1xf32> to vector<2x128xf32>
    %c0_7 = arith.constant 0 : index
    %c0_8 = arith.constant 0 : index
    %22 = vector.load %arg2[%c0_7, %c0_8] : memref<2x128xf32, #tpu.memory_space<vmem>>, vector<2x128xf32>
    tpu.vector_store %arg2[%c0_7, %c0_8], %21 {strides = array<i32>} : memref<2x128xf32, #tpu.memory_space<vmem>>, vector<2x128xf32>,
    return
  }
}

</mosaic_0001>

<llo_original>
// kernel: _forward.1
$region0: #{_forward.1}
  #allocation0 [shape = 'u32[]', space=smem, size = 0x4, offset = 0x4, fixed_abs, tag = 'smem constant byte address 0x4 - core index']
  #allocation1 [shape = 'u32[72,128]{1,0:T(1,128)}', space=vmem, size = 0x9000, scoped, tag = 'internal scratch']
  %s0 = inlined_call_operand.hbm [shape: f32[2,3], index: 0, kind: input, shape index: {}]
  %s1 = inlined_call_operand.hbm [shape: f32[1,4], index: 1, kind: input, shape index: {}]
  %s2 = inlined_call_operand.vmem [shape: f32[2,128], index: 2, kind: output, shape index: {}]
  %s3 = sld [smem:[#allocation0]]
  $region26: #{_forward.1} parent=0
    _
  %s5 = ssub.s32 1, %s3
  %s6 = scalar_select 0, %s5, %s3
  $region1: #{_forward.1} parent=0
    #allocation2 [shape = 'u8[1024]{0}', space=vmem, size = 0x400, scoped, tag = 'input window, operand 0, single buffered']
    #allocation3 [shape = 's32[1]{0}', space=sflag, size = 0x4, scoped, tag = 'scoped memory for _forward.1']
    #allocation4 [shape = 'u8[512]{0}', space=vmem, size = 0x400, scoped, tag = 'input window, operand 1, single buffered']
    #allocation5 [shape = 's32[1]{0}', space=sflag, size = 0x4, scoped, tag = 'scoped memory for _forward.1']
    %7 = vsyncpa [#allocation3], 0
    %8 = vsyncpa [#allocation5], 0
    // Predicated region
    $region2: #{_forward.1} parent=1 // pred_check
      _
    $region3: #{_forward.1} parent=1 // pred_check_branch
      %10 = sbr.rel (0) target = $region5
    $region4: #{_forward.1} parent=1 // pred_region
      %12 = vsyncadd [#allocation3], 0
      %s14 = sshll.u32 %s0, 4
      %s15 = int_to_ptr.hbm [resolvable:$true] %s14
      %s16 = sshll.u32 [#allocation2], 4
      %s17 = int_to_ptr.vmem [resolvable:$true] %s16
      %19 = dma.hbm_to_vmem [thread:$0]  %s15, 32, %s17, [#allocation3]
    $region5: #{_forward.1} parent=1 // pred_fallthru
      _
    // Predicated region
    $region6: #{_forward.1} parent=1 // pred_check
      _
    $region7: #{_forward.1} parent=1 // pred_check_branch
      %21 = sbr.rel (0) target = $region9
    $region8: #{_forward.1} parent=1 // pred_region
      %23 = vsyncadd [#allocation5], 0
      %s25 = sshll.u32 %s1, 4
      %s26 = int_to_ptr.hbm [resolvable:$true] %s25
      %s27 = sshll.u32 [#allocation4], 4
      %s28 = int_to_ptr.vmem [resolvable:$true] %s27
      %30 = dma.hbm_to_vmem [thread:$0]  %s26, 16, %s28, [#allocation5]
    $region9: #{_forward.1} parent=1 // pred_fallthru
      _
    // Predicated region
    $region10: #{_forward.1} parent=1 // pred_check
      _
    $region11: #{_forward.1} parent=1 // pred_check_branch
      %32 = sbr.rel (0) target = $region13
    $region12: #{_forward.1} parent=1 // pred_region
      %34 = dma.done [#allocation3], 32
    $region13: #{_forward.1} parent=1 // pred_fallthru
      _
    // Predicated region
    $region14: #{_forward.1} parent=1 // pred_check
      _
    $region15: #{_forward.1} parent=1 // pred_check_branch
      %36 = sbr.rel (0) target = $region17
    $region16: #{_forward.1} parent=1 // pred_region
      %38 = dma.done [#allocation5], 16
    $region17: #{_forward.1} parent=1 // pred_fallthru
      _
    %v39 = vld [vmem:[#allocation4] sm:$0x1]
    %v40 = vld [vmem:[#allocation2] sm:$0x3]
    %v42 = vperm.slane %v39, 0
    %v44 = vmul.f32 %v40, %v42
    %vm45 = vcmask 17408
    %v46 = vsel %vm45, %v44, 0.0
    %47 = vadd.xlane.f32.xlu0 %v46
    %v48 = vpop.xlane.xlu0 %47
    %v49 = vadd.f32 %v48, %v42
    %51 = vrot.lane.b32.xlu0 %v49, 125
    %v52 = vpop.permute.xlu0 %51
    %vm54 = vcmask 1024
    %v55 = vsel %vm54, %v52, 0.0
    %56 = vadd.xlane.f32.xlu0 %v55
    %v57 = vpop.xlane.xlu0 %56
    %v58 = vrot.slane %v57, 4
    %v59 = vadd.f32 %v57, %v58
    %v60 = vrot.slane %v59, 2
    %v61 = vadd.f32 %v59, %v60
    %v62 = vrot.slane %v61, 1
    %v63 = vadd.f32 %v61, %v62
    %s64 = vtos %v63
    %p65 = scmp.ne.f32.partialorder %s64, 0.0
    %v66 = vmul.f32 %v49, 2.0
    %v67 = vsub.f32 0.0, %v49
    %s68 = scalar_select %p65, 1, 0
    %v69 = vstv %s68
    %vm70 = vcmp.eq.s32.totalorder %v69, 1
    %v71 = vsel %vm70, %v66, %v67
    %73 = vset.pattern.permute.xlu0 3
    %74 = vperm.xlu0 %73, %v71
    %v75 = vpop.permute.xlu0 %74
    %77 = vst [vmem:[%s2] sm:$0x3] %v75
    // Predicated region
    $region18: #{_forward.1} parent=1 // pred_check
      _
    $region19: #{_forward.1} parent=1 // pred_check_branch
      %79 = sbr.rel (0) target = $region21
    $region20: #{_forward.1} parent=1 // pred_region
      _
    $region21: #{_forward.1} parent=1 // pred_fallthru
      _
    // Predicated region
    $region22: #{_forward.1} parent=1 // pred_check
      _
    $region23: #{_forward.1} parent=1 // pred_check_branch
      %81 = sbr.rel (0) target = $region25
    $region24: #{_forward.1} parent=1 // pred_region
      _
    $region25: #{_forward.1} parent=1 // pred_fallthru
      _
    %82 = vsyncpa [#allocation3], 1
    %83 = vsyncpa [#allocation5], 1

</llo_original>
